<compile_context>
chip_gen: v6e
topology: v6e:2x2x1
jax: 0.10.0
libtpu: 0.0.40
codegen_flags: <defaults>
</compile_context>

<pallas_src>
import jax
import jax.numpy as jnp
from jax.experimental import pallas as pl
from jax.experimental.pallas import tpu as pltpu


def linear_kernel(x_ref, w_ref, b_ref, o_ref):
    # x_ref: (M_tile, IN), w_ref: (IN, OUT), b_ref: (1, OUT), o_ref: (M_tile, OUT)
    o_ref[...] = (
        jnp.dot(x_ref[...], w_ref[...], preferred_element_type=jnp.float32)
        + b_ref[...]
    )


def linear_pallas(x, w_t, bias, *, tile_m=2048, single_shot_max=256):
    """x: (B, S, IN) f32; w_t: (IN, OUT) pre-transposed weight; bias: (OUT,)."""
    B, S, IN = x.shape
    OUT = w_t.shape[1]
    M = B * S

    x2d = x.reshape(M, IN)
    b2d = bias.reshape(1, OUT)

    if M <= single_shot_max:
        # Tiny / single-shot path: no grid -> no pipeline machinery, one
        # kernel invocation with everything resident in VMEM.
        out2d = pl.pallas_call(
            linear_kernel,
            out_shape=jax.ShapeDtypeStruct((M, OUT), jnp.float32),
            in_specs=[
                pl.BlockSpec(memory_space=pltpu.MemorySpace.VMEM),
                pl.BlockSpec(memory_space=pltpu.MemorySpace.VMEM),
                pl.BlockSpec(memory_space=pltpu.MemorySpace.VMEM),
            ],
            out_specs=pl.BlockSpec(memory_space=pltpu.MemorySpace.VMEM),
        )(x2d, w_t, b2d)
    else:
        # Large-batch path: tile M (ragged last tile handled by Pallas, no
        # external pad/slice), keep weight/bias resident across the grid, and
        # mark the row axis "parallel" so both TensorCores are used on v7x.
        half = -(-M // 2)                       # ceil(M / 2)
        half = ((half + 7) // 8) * 8            # round to sublane multiple
        tm = min(tile_m, half)                  # ensure grid_m >= 2
        tm = max(8, (tm // 8) * 8)              # keep (8,128)-rule: tm % 8 == 0
        grid_m = pl.cdiv(M, tm)

        out2d = pl.pallas_call(
            linear_kernel,
            out_shape=jax.ShapeDtypeStruct((M, OUT), jnp.float32),
            grid=(grid_m,),
            in_specs=[
                pl.BlockSpec((tm, IN), lambda i: (i, 0)),
                pl.BlockSpec((IN, OUT), lambda i: (0, 0)),   # resident weight
                pl.BlockSpec((1, OUT), lambda i: (0, 0)),    # resident bias
            ],
            out_specs=pl.BlockSpec((tm, OUT), lambda i: (i, 0)),
            compiler_params=pltpu.CompilerParams(
                dimension_semantics=("parallel",)),
        )(x2d, w_t, b2d)

    return out2d.reshape(B, S, OUT)


if __name__ == "__main__":
    B, S, IN, OUT = 2, 3, 100, 10

    key = jax.random.PRNGKey(0)
    kx, kw, kb = jax.random.split(key, 3)

    # Deterministic parameter init (uniform +/- 1/sqrt(fan_in), like torch's
    # default Linear init); synthetic weights, no checkpoint load.
    bound = 1.0 / jnp.sqrt(jnp.float32(IN))
    weight = jax.random.uniform(kw, (OUT, IN), jnp.float32, -bound, bound)
    bias = jax.random.uniform(kb, (OUT,), jnp.float32, -bound, bound)

    # One-time init cost (parameter storage layout), NOT in the per-call path.
    w_t = jnp.asarray(weight.T)  # (IN, OUT)

    # ---- spec shape: ones of (2, 3, 100), tiny no-grid path --------------
    x = jnp.ones((B, S, IN), jnp.float32)
    out = linear_pallas(x, w_t, bias)
    out = jax.block_until_ready(out)

    ref = x @ weight.T + bias
    assert out.shape == (B, S, OUT), out.shape
    assert jnp.allclose(out, ref, atol=1e-5, rtol=1e-5), float(
        jnp.max(jnp.abs(out - ref)))

    # ---- large-M path sanity check (ragged last tile, no pad/slice) ------
    Bb, Sb = 4, 700                       # M = 2800 -> grid_m >= 2, ragged tile
    xb = jax.random.normal(kx, (Bb, Sb, IN), jnp.float32)
    outb = linear_pallas(xb, w_t, bias)
    outb = jax.block_until_ready(outb)
    refb = xb @ weight.T + bias
    assert outb.shape == (Bb, Sb, OUT), outb.shape
    assert jnp.allclose(outb, refb, atol=1e-4, rtol=1e-4), float(
        jnp.max(jnp.abs(outb - refb)))

    print("KERNEL_OK")
</pallas_src>

<mosaic_0001>
module attributes {stable_mosaic.version = 11 : i64} {
  func.func @linear_kernel(%arg0: memref<6x100xf32, #tpu.memory_space<vmem>>, %arg1: memref<100x10xf32, #tpu.memory_space<vmem>>, %arg2: memref<1x10xf32, #tpu.memory_space<vmem>>, %arg3: memref<6x10xf32, #tpu.memory_space<vmem>>) attributes {dimension_semantics = [], scalar_prefetch = 0 : i64, scratch_operands = 0 : i64, tpu.core_type = #tpu.core_type<tc>} {
    %c0 = arith.constant 0 : index
    %c0_0 = arith.constant 0 : index
    %0 = vector.load %arg0[%c0, %c0_0] : memref<6x100xf32, #tpu.memory_space<vmem>>, vector<6x100xf32>
    %c0_1 = arith.constant 0 : index
    %c0_2 = arith.constant 0 : index
    %1 = vector.load %arg1[%c0_1, %c0_2] : memref<100x10xf32, #tpu.memory_space<vmem>>, vector<100x10xf32>
    %cst = arith.constant dense<0.000000e+00> : vector<6x10xf32>
    %2 = tpu.matmul %0, %1, %cst {dimension_numbers = #tpu.dot_dimension_numbers<[1], [0], [0], [1], [0, 0, 1, 1], [], []>} : vector<6x100xf32>, vector<100x10xf32>, vector<6x10xf32> -> vector<6x10xf32>
    %c0_3 = arith.constant 0 : index
    %c0_4 = arith.constant 0 : index
    %3 = vector.load %arg2[%c0_3, %c0_4] : memref<1x10xf32, #tpu.memory_space<vmem>>, vector<1x10xf32>
    %4 = vector.broadcast %3 : vector<1x10xf32> to vector<6x10xf32>
    %5 = arith.addf %2, %4 : vector<6x10xf32>
    %c0_5 = arith.constant 0 : index
    %c0_6 = arith.constant 0 : index
    %6 = vector.load %arg3[%c0_5, %c0_6] : memref<6x10xf32, #tpu.memory_space<vmem>>, vector<6x10xf32>
    tpu.vector_store %arg3[%c0_5, %c0_6], %5 {strides = array<i32>} : memref<6x10xf32, #tpu.memory_space<vmem>>, vector<6x10xf32>,
    return
  }
}

</mosaic_0001>

<llo_original>
// kernel: tpu_custom_call.1
$region0: #{tpu_custom_call.1}
  #allocation0 [shape = 'u32[]', space=smem, size = 0x4, offset = 0x4, fixed_abs, tag = 'smem constant byte address 0x4 - core index']
  #allocation1 [shape = 'u32[144,128]{1,0:T(1,128)}', space=vmem, size = 0x12000, scoped, tag = 'internal scratch']
  %s0 = inlined_call_operand.vmem [shape: f32[6,100], index: 0, kind: input, shape index: {}]
  %s1 = inlined_call_operand.vmem [shape: f32[100,10], index: 1, kind: input, shape index: {}]
  %s2 = inlined_call_operand.vmem [shape: f32[1,10], index: 2, kind: input, shape index: {}]
  %s3 = inlined_call_operand.hbm [shape: f32[6,10], index: 3, kind: output, shape index: {}]
  %s4 = sld [smem:[#allocation0]]
  $region22: #{tpu_custom_call.1} parent=0
    _
  %s6 = ssub.s32 1, %s4
  %s7 = scalar_select 0, %s6, %s4
  $region1: #{tpu_custom_call.1} parent=0
    #allocation2 [shape = 'u8[4096]{0}', space=vmem, size = 0x1000, scoped, tag = 'output window, operand 0, single buffered']
    #allocation3 [shape = 's32[1]{0}', space=sflag, size = 0x4, scoped, tag = 'scoped memory for tpu_custom_call.1']
    %8 = vsyncpa [#allocation3], 0
    // Predicated region
    $region2: #{tpu_custom_call.1} parent=1 // pred_check
      _
    $region3: #{tpu_custom_call.1} parent=1 // pred_check_branch
      %10 = sbr.rel (0) target = $region5
    $region4: #{tpu_custom_call.1} parent=1 // pred_region
      _
    $region5: #{tpu_custom_call.1} parent=1 // pred_fallthru
      _
    // Predicated region
    $region6: #{tpu_custom_call.1} parent=1 // pred_check
      _
    $region7: #{tpu_custom_call.1} parent=1 // pred_check_branch
      %12 = sbr.rel (0) target = $region9
    $region8: #{tpu_custom_call.1} parent=1 // pred_region
      _
    $region9: #{tpu_custom_call.1} parent=1 // pred_fallthru
      _
    // Predicated region
    $region10: #{tpu_custom_call.1} parent=1 // pred_check
      _
    $region11: #{tpu_custom_call.1} parent=1 // pred_check_branch
      %14 = sbr.rel (0) target = $region13
    $region12: #{tpu_custom_call.1} parent=1 // pred_region
      _
    $region13: #{tpu_custom_call.1} parent=1 // pred_fallthru
      _
    %v15 = vld [vmem:[%s0] sm:$0x3f]
    %v16 = vld [vmem:[%s1] sm:$0xff]
    %v17 = vld [vmem:[%s1 + $0x8] sm:$0xff]
    %v18 = vld [vmem:[%s1 + $0x10] sm:$0xff]
    %v19 = vld [vmem:[%s1 + $0x18] sm:$0xff]
    %v20 = vld [vmem:[%s1 + $0x20] sm:$0xff]
    %v21 = vld [vmem:[%s1 + $0x28] sm:$0xff]
    %v22 = vld [vmem:[%s1 + $0x30] sm:$0xff]
    %v23 = vld [vmem:[%s1 + $0x38] sm:$0xff]
    %v24 = vld [vmem:[%s1 + $0x40] sm:$0xff]
    %v25 = vld [vmem:[%s1 + $0x48] sm:$0xff]
    %v26 = vld [vmem:[%s1 + $0x50] sm:$0xff]
    %v27 = vld [vmem:[%s1 + $0x58] sm:$0xff]
    %v28 = vld [vmem:[%s1 + $0x60] sm:$0xf]
    %v29 = vld [vmem:[%s2] sm:$0x1]
    %v31 = vlaneseq
    %v32 = vshrl.u32 %v31, 7
    %v33 = vsub.s32 0, %v32
    %v34 = vrot.slane %v29, %v33
    %vm36 = vcmask 818176
    %v38 = vsel %vm36, %v15, 0
    %vm40 = vcmask 1043456
    %v42 = vsel %vm40, %v28, 0
    %44 = vmatprep.subr.mxu0 0.0
    %45 = vmatpush1.msra.mxu0 0.0
    %46 = vmatprep.subr.mxu0 0.0
    %47 = vmatpush1.msra.mxu0 0.0
    %48 = vmatprep.subr.mxu0 0.0
    %49 = vmatpush1.msra.mxu0 0.0
    %50 = vmatprep.subr.mxu0 0.0
    %51 = vmatpush1.msra.mxu0 %v42
    %52 = vmatprep.subr.mxu0 0.0
    %53 = vmatpush1.msra.mxu0 %v27
    %54 = vmatprep.subr.mxu0 0.0
    %55 = vmatpush1.msra.mxu0 %v26
    %56 = vmatprep.subr.mxu0 0.0
    %57 = vmatpush1.msra.mxu0 %v25
    %58 = vmatprep.subr.mxu0 0.0
    %59 = vmatpush1.msra.mxu0 %v24
    %60 = vmatprep.subr.mxu0 0.0
    %61 = vmatpush1.msra.mxu0 %v23
    %62 = vmatprep.subr.mxu0 0.0
    %63 = vmatpush1.msra.mxu0 %v22
    %64 = vmatprep.subr.mxu0 0.0
    %65 = vmatpush1.msra.mxu0 %v21
    %66 = vmatprep.subr.mxu0 0.0
    %67 = vmatpush1.msra.mxu0 %v20
    %68 = vmatprep.subr.mxu0 0.0
    %69 = vmatpush1.msra.mxu0 %v19
    %70 = vmatprep.subr.mxu0 0.0
    %71 = vmatpush1.msra.mxu0 %v18
    %72 = vmatprep.subr.mxu0 0.0
    %73 = vmatpush1.msra.mxu0 %v17
    %74 = vmatprep.subr.mxu0 0.0
    %75 = vmatpush1.msra.mxu0 %v16
    %76 = vmatprep.subr.mxu0 0.0
    %77 = vmatpush2.msra.mxu0 0.0
    %78 = vmatprep.subr.mxu0 0.0
    %79 = vmatpush2.msra.mxu0 0.0
    %80 = vmatprep.subr.mxu0 0.0
    %81 = vmatpush2.msra.mxu0 0.0
    %82 = vmatprep.subr.mxu0 0.0
    %83 = vmatpush2.msra.mxu0 0.0
    %84 = vmatprep.subr.mxu0 0.0
    %85 = vmatpush2.msra.mxu0 0.0
    %86 = vmatprep.subr.mxu0 0.0
    %87 = vmatpush2.msra.mxu0 0.0
    %88 = vmatprep.subr.mxu0 0.0
    %89 = vmatpush2.msra.mxu0 0.0
    %90 = vmatprep.subr.mxu0 0.0
    %91 = vmatpush2.msra.mxu0 0.0
    %92 = vmatprep.subr.mxu0 0.0
    %93 = vmatpush2.msra.mxu0 0.0
    %94 = vmatprep.subr.mxu0 0.0
    %95 = vmatpush2.msra.mxu0 0.0
    %96 = vmatprep.subr.mxu0 0.0
    %97 = vmatpush2.msra.mxu0 0.0
    %98 = vmatprep.subr.mxu0 0.0
    %99 = vmatpush2.msra.mxu0 0.0
    %100 = vmatprep.subr.mxu0 0.0
    %101 = vmatpush2.msra.mxu0 0.0
    %102 = vmatprep.subr.mxu0 0.0
    %103 = vmatpush2.msra.mxu0 0.0
    %104 = vmatprep.subr.mxu0 0.0
    %105 = vmatpush2.msra.mxu0 0.0
    %106 = vmatprep.subr.mxu0 0.0
    %107 = vmatpush2.msra.mxu0 0.0
    %108 = vmatprep.mubr.f32.mxu0 0.0
    %109 = vmatmul.mubr.f32.gmra.mxu0 %v38
    %v110 = vpop.f32.mrf.mxu0
    %v111 = vadd.f32 %v34, %v110
    %v112 = vpop.f32.mrf.mxu0
    %113 = vdwg.mxu0
    %vm114 = vcmask 78848
    %115 = vst.msk [vmem:[#allocation2] sm:$0x3f] %vm114, %v111
    // Predicated region
    $region14: #{tpu_custom_call.1} parent=1 // pred_check
      _
    $region15: #{tpu_custom_call.1} parent=1 // pred_check_branch
      %117 = sbr.rel (0) target = $region17
    $region16: #{tpu_custom_call.1} parent=1 // pred_region
      %s119 = ssub.s32 128, 128
      %120 = vsyncadd [#allocation3], %s119
      %s122 = sshll.u32 [#allocation2], 4
      %s123 = int_to_ptr.vmem [resolvable:$true] %s122
      %125 = dma.vmem_to_hbm [thread:$0]  %s123, 128, %s3, [#allocation3]
    $region17: #{tpu_custom_call.1} parent=1 // pred_fallthru
      _
    // Predicated region
    $region18: #{tpu_custom_call.1} parent=1 // pred_check
      _
    $region19: #{tpu_custom_call.1} parent=1 // pred_check_branch
      %127 = sbr.rel (0) target = $region21
    $region20: #{tpu_custom_call.1} parent=1 // pred_region
      %128 = dma.done [#allocation3], 128
    $region21: #{tpu_custom_call.1} parent=1 // pred_fallthru
      _
    %129 = vsyncpa [#allocation3], 1

</llo_original>
